<compile_context>
chip_gen: v5e
topology: v5e:2x2
jax: 0.10.0
libtpu: 0.0.40
codegen_flags: <defaults>
</compile_context>

<pallas_src>
import functools

import jax
import jax.numpy as jnp
from jax.experimental import pallas as pl
from jax.experimental.pallas import tpu as pltpu


# -----------------------------------------------------------------------------
# Kernel: pad every row of a (R, l_in) matrix with `lead` zeros before and
# `tail` zeros after, producing (R, l_out) with l_out = lead + l_in + tail.
# One full-block, lane-dense store per tile.
# -----------------------------------------------------------------------------
def _row_pad_kernel(x_ref, o_ref, *, lead, tail):
    x = x_ref[...]
    rb = x.shape[0]
    parts = []
    if lead > 0:
        parts.append(jnp.zeros((rb, lead), x.dtype))
    parts.append(x)
    if tail > 0:
        parts.append(jnp.zeros((rb, tail), x.dtype))
    o_ref[...] = jnp.concatenate(parts, axis=1) if len(parts) > 1 else x


# -----------------------------------------------------------------------------
# Per-generation VMEM budget (double-buffer aware) + block-size heuristic
# -----------------------------------------------------------------------------
def _vmem_budget():
    """Returns (max resident double-buffered tile bytes, vmem_limit_bytes)."""
    try:
        cap = int(pltpu.get_tpu_info().vmem_capacity_bytes)
    except Exception:
        cap = 64 << 20  # conservative: v7x per-TC VMEM; safe on v5e/v6e too
    buffers = cap // 2          # 2 input bufs + 2 output bufs must stay under this
    limit = (cap * 3) // 4      # requested scoped limit; headroom for compiler scratch
    return buffers, limit


def _pick_row_block(num_rows, bytes_per_row, buffer_budget,
                    target_steps=4, min_step_bytes=512 << 10):
    """Rows per tile.

    Candidates are multiples of 8 (sublane rule) that divide num_rows, plus the
    full extent.  Residency is accounted as double-buffered in+out.  Prefers
    >= target_steps grid steps (v7x has 2 TensorCores and needs >=4 parallel
    steps; pipelining needs >=2) as long as each step still moves a useful
    amount of HBM traffic; otherwise takes the largest tile that fits.
    Returns None if even the minimum legal tile overflows the budget.
    """
    cands = sorted({d for d in range(8, num_rows + 1, 8) if num_rows % d == 0}
                   | {num_rows})
    fit = [c for c in cands if 2 * c * bytes_per_row <= buffer_budget]
    if not fit:
        return None
    stepped4 = [c for c in fit if num_rows // c >= target_steps]
    if stepped4 and max(stepped4) * bytes_per_row >= min_step_bytes:
        return max(stepped4)
    stepped2 = [c for c in fit if num_rows // c >= 2]
    if stepped2:
        return max(stepped2)
    return max(fit)


def _xla_pad(x, ph, pw):
    return jnp.pad(x, ((0, 0), (0, 0), (ph, ph), (pw, pw)))


# -----------------------------------------------------------------------------
# Wrapper
# -----------------------------------------------------------------------------
def square_pad(x: jax.Array) -> jax.Array:
    """Pads the smaller spatial dim so the image becomes (near-)square.

    x: (N, C, H, W) array.  Returns (N, C, H_out, W_out).
    """
    N, C, H, W = x.shape
    if H < W:
        ph, pw = (W - H) // 2, 0
    elif W < H:
        ph, pw = 0, (H - W) // 2
    else:
        ph, pw = 0, 0

    # Already (near-)square -> identity, matching transforms.Pad([0, 0]).
    if ph == 0 and pw == 0:
        return x

    itemsize = jnp.dtype(x.dtype).itemsize
    buffer_budget, vmem_limit = _vmem_budget()

    if ph > 0:
        # Pad height: one row = one flattened (H, W) plane; lead/tail = ph rows.
        R, l_in, lead = N * C, H * W, ph * W
        out_shape4 = (N, C, H + 2 * ph, W)
    else:
        # Pad width: one row = one image row of W pixels; lead/tail = pw.
        W_out = W + 2 * pw
        if W_out < 128:
            # Narrow output rows would force a masked vst on every row (the
            # single biggest documented lever); XLA's pad is near roofline here.
            return _xla_pad(x, 0, pw)
        R, l_in, lead = N * C * H, W, pw
        out_shape4 = (N, C, H, W_out)

    tail = lead                       # symmetric padding
    l_out = lead + l_in + tail
    bytes_per_row = (l_in + l_out) * itemsize

    rb = _pick_row_block(R, bytes_per_row, buffer_budget)
    if rb is None:
        # TODO(synk): lane-blocked kernel (2-D grid over rows AND chunks of the
        # flattened axis) or a direct strided HBM->HBM DMA for planes whose
        # minimum legal tile exceeds the VMEM budget; fall back to XLA for now.
        return _xla_pad(x, ph, pw)

    xf = x.reshape(R, l_in)           # contiguous reshape, no data movement
    kernel = functools.partial(_row_pad_kernel, lead=lead, tail=tail)
    out = pl.pallas_call(
        kernel,
        out_shape=jax.ShapeDtypeStruct((R, l_out), x.dtype),
        grid=(R // rb,),
        in_specs=[pl.BlockSpec((rb, l_in), lambda i: (i, 0))],
        out_specs=pl.BlockSpec((rb, l_out), lambda i: (i, 0)),
        compiler_params=pltpu.CompilerParams(
            dimension_semantics=("parallel",),
            vmem_limit_bytes=vmem_limit),
    )(xf)
    return out.reshape(out_shape4)


if __name__ == "__main__":
    key = jax.random.PRNGKey(0)
    k1, k2, k3, k4 = jax.random.split(key, 4)

    # 1) H=12 < W=16 -> pad height by 2 per side -> 16x16 (flat Pallas path).
    x1 = jax.random.normal(k1, (2, 4, 12, 16), dtype=jnp.float32)
    o1 = jax.block_until_ready(square_pad(x1))
    assert o1.shape == (2, 4, 16, 16), o1.shape
    assert jnp.array_equal(o1, jnp.pad(x1, ((0, 0), (0, 0), (2, 2), (0, 0))))

    # 2) W=120 < H=136, W_out=136 >= 128 -> pad width (flat Pallas path).
    x2 = jax.random.normal(k2, (1, 2, 136, 120), dtype=jnp.float32)
    o2 = jax.block_until_ready(square_pad(x2))
    assert o2.shape == (1, 2, 136, 136), o2.shape
    assert jnp.array_equal(o2, jnp.pad(x2, ((0, 0), (0, 0), (0, 0), (8, 8))))

    # 3) W=12 < H=16, narrow W_out=16 -> XLA pad fallback (per perf review).
    x3 = jax.random.normal(k3, (2, 4, 16, 12), dtype=jnp.float32)
    o3 = jax.block_until_ready(square_pad(x3))
    assert o3.shape == (2, 4, 16, 16), o3.shape
    assert jnp.array_equal(o3, jnp.pad(x3, ((0, 0), (0, 0), (0, 0), (2, 2))))

    # 4) Already square -> identity short-circuit, no kernel launch.
    x4 = jax.random.normal(k4, (1, 3, 16, 16), dtype=jnp.float32)
    o4 = jax.block_until_ready(square_pad(x4))
    assert o4.shape == x4.shape and jnp.array_equal(o4, x4)

    print("KERNEL_OK")
</pallas_src>

<mosaic_0001>
module attributes {stable_mosaic.version = 11 : i64} {
  func.func @_row_pad_kernel(%arg0: i32, %arg1: memref<8x192xf32, #tpu.memory_space<vmem>>, %arg2: memref<8x256xf32, #tpu.memory_space<vmem>>) attributes {dimension_semantics = [#tpu.dimension_semantics<parallel>], iteration_bounds = array<i64: 1>, scalar_prefetch = 0 : i64, scratch_operands = 0 : i64, tpu.core_type = #tpu.core_type<tc>, window_params = [{transform_indices = @transform_0, window_bounds = array<i64: 8, 192>}, {transform_indices = @transform_1, window_bounds = array<i64: 8, 256>}]} {
    %c0 = arith.constant 0 : index
    %c0_0 = arith.constant 0 : index
    %0 = vector.load %arg1[%c0, %c0_0] : memref<8x192xf32, #tpu.memory_space<vmem>>, vector<8x192xf32>
    %cst = arith.constant 0.000000e+00 : f32
    %1 = vector.broadcast %cst : f32 to vector<8x32xf32>
    %cst_1 = arith.constant 0.000000e+00 : f32
    %2 = vector.broadcast %cst_1 : f32 to vector<8x32xf32>
    %3 = tpu.concatenate %1, %0, %2 in 1 : vector<8x32xf32>, vector<8x192xf32>, vector<8x32xf32> -> vector<8x256xf32>
    %c0_2 = arith.constant 0 : index
    %c0_3 = arith.constant 0 : index
    %4 = vector.load %arg2[%c0_2, %c0_3] : memref<8x256xf32, #tpu.memory_space<vmem>>, vector<8x256xf32>
    tpu.vector_store %arg2[%c0_2, %c0_3], %3 {strides = array<i32>} : memref<8x256xf32, #tpu.memory_space<vmem>>, vector<8x256xf32>,
    return
  }
  func.func @transform_0(%arg0: i32) -> (i32, i32) {
    %c0_i32 = arith.constant 0 : i32
    %c0_i32_0 = arith.constant 0 : i32
    return %arg0, %c0_i32 : i32, i32
  }
  func.func @transform_1(%arg0: i32) -> (i32, i32) {
    %c0_i32 = arith.constant 0 : i32
    %c0_i32_0 = arith.constant 0 : i32
    return %arg0, %c0_i32 : i32, i32
  }
}

</mosaic_0001>

<llo_original>
// kernel: tpu_custom_call.1
$region0: #{tpu_custom_call.1}
  #allocation0 [shape = 'u32[]', space=smem, size = 0x4, offset = 0x4, fixed_abs, tag = 'smem constant byte address 0x4 - core index']
  #allocation1 [shape = 'u32[72,128]{1,0:T(1,128)}', space=vmem, size = 0x9000, scoped, tag = 'internal scratch']
  %s0 = inlined_call_operand.hbm [shape: f32[8,192], index: 0, kind: input, shape index: {}]
  %s1 = inlined_call_operand.hbm [shape: f32[8,256], index: 1, kind: output, shape index: {}]
  %s2 = sld [smem:[#allocation0]]
  $region18: #{tpu_custom_call.1} parent=0
    _
  %s4 = ssub.s32 1, %s2
  %s5 = scalar_select 0, %s4, %s2
  $region1: #{tpu_custom_call.1} parent=0
    #allocation2 [shape = 'u8[8192]{0}', space=vmem, size = 0x2000, scoped, tag = 'input window, operand 0, single buffered']
    #allocation3 [shape = 's32[1]{0}', space=sflag, size = 0x4, scoped, tag = 'scoped memory for tpu_custom_call.1']
    #allocation4 [shape = 's32[1]{0}', space=sflag, size = 0x4, scoped, tag = 'scoped memory for tpu_custom_call.1']
    #allocation5 [shape = 'u8[8192]{0}', space=vmem, size = 0x2000, scoped, tag = 'output window, operand 0, single buffered']
    %6 = vsyncpa [#allocation3], 0
    %7 = vsyncpa [#allocation4], 0
    // Predicated region
    $region2: #{tpu_custom_call.1} parent=1 // pred_check
      _
    $region3: #{tpu_custom_call.1} parent=1 // pred_check_branch
      %9 = sbr.rel (0) target = $region5
    $region4: #{tpu_custom_call.1} parent=1 // pred_region
      %11 = vsyncadd [#allocation3], 0
      %s13 = sshll.u32 %s0, 4
      %s14 = int_to_ptr.hbm [resolvable:$true] %s13
      %s15 = sshll.u32 [#allocation2], 4
      %s16 = int_to_ptr.vmem [resolvable:$true] %s15
      %18 = dma.hbm_to_vmem [thread:$0]  %s14, 256, %s16, [#allocation3]
    $region5: #{tpu_custom_call.1} parent=1 // pred_fallthru
      _
    // Predicated region
    $region6: #{tpu_custom_call.1} parent=1 // pred_check
      _
    $region7: #{tpu_custom_call.1} parent=1 // pred_check_branch
      %20 = sbr.rel (0) target = $region9
    $region8: #{tpu_custom_call.1} parent=1 // pred_region
      %22 = dma.done [#allocation3], 256
    $region9: #{tpu_custom_call.1} parent=1 // pred_fallthru
      _
    %v23 = vld [vmem:[#allocation2] sm:$0xff]
    %v24 = vld [vmem:[#allocation2 + $0x8] sm:$0xff]
    %27 = vrot.lane.b32.xlu0 %v23, 32
    %v28 = vpop.permute.xlu0 %27
    %29 = vrot.lane.b32.xlu0 %v24, 32
    %v30 = vpop.permute.xlu0 %29
    %vm31 = vcmask 261120
    %v32 = vsel %vm31, %v28, %v30
    %v35 = vsel %vm31, 0.0, %v28
    %vm36 = vcmask 785408
    %v37 = vsel %vm36, %v32, 0.0
    %38 = vst [vmem:[#allocation5] sm:$0xff] %v35
    %39 = vst [vmem:[#allocation5 + $0x8] sm:$0xff] %v37
    // Predicated region
    $region10: #{tpu_custom_call.1} parent=1 // pred_check
      _
    $region11: #{tpu_custom_call.1} parent=1 // pred_check_branch
      %41 = sbr.rel (0) target = $region13
    $region12: #{tpu_custom_call.1} parent=1 // pred_region
      %43 = vsyncadd [#allocation4], 0
      %s45 = sshll.u32 [#allocation5], 4
      %s46 = int_to_ptr.vmem [resolvable:$true] %s45
      %s47 = sshll.u32 %s1, 4
      %s48 = int_to_ptr.hbm [resolvable:$true] %s47
      %50 = dma.vmem_to_hbm [thread:$0]  %s46, 256, %s48, [#allocation4]
    $region13: #{tpu_custom_call.1} parent=1 // pred_fallthru
      _
    // Predicated region
    $region14: #{tpu_custom_call.1} parent=1 // pred_check
      _
    $region15: #{tpu_custom_call.1} parent=1 // pred_check_branch
      %52 = sbr.rel (0) target = $region17
    $region16: #{tpu_custom_call.1} parent=1 // pred_region
      %54 = dma.done [#allocation4], 256
    $region17: #{tpu_custom_call.1} parent=1 // pred_fallthru
      _
    %55 = vsyncpa [#allocation3], 1
    %56 = vsyncpa [#allocation4], 1

</llo_original>
